<compile_context>
chip_gen: v6e
topology: v6e:2x2x1
jax: 0.10.0
libtpu: 0.0.40
codegen_flags: <defaults>
</compile_context>

<pallas_src>
import numpy as np
import jax
import jax.numpy as jnp
from jax.experimental import pallas as pl
from jax.experimental.pallas import tpu as pltpu

LN_EPS = 1e-5

# Rows of the packed (11, H) f32 parameter slab.
_B1, _G1, _BE1 = 0, 1, 2
_B2, _G2, _BE2 = 3, 4, 5
_B3, _G3, _BE3 = 6, 7, 8
_W4T, _B4 = 9, 10

# dot_general contraction: (M, K) x (N, K) -> (M, N)   (i.e. a @ b.T)
_TRANS_B_DIMS = (((1,), (1,)), ((), ()))


def _critic_kernel(sa_ref, w1_ref, w2_ref, w3_ref, p_ref, o_ref):
    H = w2_ref.shape[1]
    inv_h = jnp.float32(1.0 / H)

    def ln_relu(h, gamma, beta):
        # Weights/biases are pre-centered over the output-feature axis, so the
        # pre-LN activations have (essentially exact) zero row mean and
        # LayerNorm reduces to  h * rsqrt(E[h^2] + eps) * gamma + beta.
        var = jnp.sum(h * h, axis=-1, keepdims=True) * inv_h
        y = h * jax.lax.rsqrt(var + LN_EPS) * gamma + beta
        return jnp.maximum(y, 0.0)

    sa = sa_ref[...]                                        # (tile, S+A) bf16

    # Layer 1: bf16 x bf16 MXU matmul, f32 accumulation.
    h = (jnp.dot(sa, w1_ref[...], preferred_element_type=jnp.float32)
         + p_ref[_B1:_B1 + 1, :])
    h = ln_relu(h, p_ref[_G1:_G1 + 1, :], p_ref[_BE1:_BE1 + 1, :])

    # Layer 2
    h = (jnp.dot(h.astype(jnp.bfloat16), w2_ref[...],
                 preferred_element_type=jnp.float32)
         + p_ref[_B2:_B2 + 1, :])
    h = ln_relu(h, p_ref[_G2:_G2 + 1, :], p_ref[_BE2:_BE2 + 1, :])

    # Layer 3
    h = (jnp.dot(h.astype(jnp.bfloat16), w3_ref[...],
                 preferred_element_type=jnp.float32)
         + p_ref[_B3:_B3 + 1, :])
    h = ln_relu(h, p_ref[_G3:_G3 + 1, :], p_ref[_BE3:_BE3 + 1, :])

    # Final layer, lane-dense: q^T = w4^T @ h^T -> (1, tile), batch on lanes.
    w4t = p_ref[_W4T:_W4T + 1, :]                           # (1, H) f32
    q = jax.lax.dot_general(w4t, h, dimension_numbers=_TRANS_B_DIMS,
                            preferred_element_type=jnp.float32)
    q = q + p_ref[_B4:_B4 + 1, 0:1]                         # broadcast scalar bias
    o_ref[...] = q.astype(o_ref.dtype)


def _default_batch_tile(B):
    # Large, lane-aligned tiles amortize the ~0.35 µs per-grid-step overhead.
    # Cap at 2048 so the per-step footprint stays well inside v7x's 64 MiB
    # VMEM (and a reasonable scoped limit on v5e).  Skip any choice that would
    # leave a single grid step when B >= 256, so v7x's second TensorCore
    # always gets work on the "parallel" axis.
    for t in (2048, 1024, 512, 256, 128):
        if B % t == 0:
            if B >= 256 and B // t < 2:
                continue
            return t
    return B


def prepare_critic_params(params):
    """One-time offline transform of the PyTorch-layout params for the kernel.

    * Pre-center W1/W2/W3 (per input row, over the output-feature axis) and
      b1/b2/b3, so pre-LayerNorm activations have zero row mean (LayerNorm is
      shift invariant -> forward output unchanged) and the kernel can skip the
      mean pass.
    * Cast the three large matmul weights to bf16 (f32 accumulation on MXU).
    * Pack all per-feature row parameters into one (11, H) f32 slab.
    """
    H = params["w2"].shape[1]

    def center(w):
        return w - jnp.mean(w, axis=-1, keepdims=True)

    w1c = center(params["w1"])
    w2c = center(params["w2"])
    w3c = center(params["w3"])
    b1c = params["b1"] - jnp.mean(params["b1"])
    b2c = params["b2"] - jnp.mean(params["b2"])
    b3c = params["b3"] - jnp.mean(params["b3"])

    pvec = jnp.concatenate([
        b1c, params["g1"], params["be1"],
        b2c, params["g2"], params["be2"],
        b3c, params["g3"], params["be3"],
        params["w4t"],
        jnp.broadcast_to(params["b4"], (1, H)),
    ], axis=0)

    return {
        "w1": w1c.astype(jnp.bfloat16),
        "w2": w2c.astype(jnp.bfloat16),
        "w3": w3c.astype(jnp.bfloat16),
        "pvec": pvec,
    }


def critic_forward(state, action, kparams, *, batch_tile=None):
    """Pallas equivalent of Critic.forward; returns q_values of shape (batch,).

    `kparams` comes from prepare_critic_params (pre-centered, bf16 weights).
    """
    B = state.shape[0]
    assert action.shape[0] == B
    # Single fused wrapper op: concat + downcast to bf16 (feeds the bf16 MXU
    # path directly; no separate f32 round trip through HBM).
    sa = jnp.concatenate([state, action], axis=-1).astype(jnp.bfloat16)
    SA = sa.shape[1]

    w1, w2, w3, pvec = kparams["w1"], kparams["w2"], kparams["w3"], kparams["pvec"]
    H = w2.shape[1]
    assert w1.shape == (SA, H)

    if batch_tile is None:
        batch_tile = _default_batch_tile(B)
    assert B % batch_tile == 0, "batch must be divisible by batch_tile"
    assert batch_tile == B or batch_tile % 128 == 0, (
        "batch_tile must equal the batch size or be a multiple of 128")

    def full_spec(arr):
        return pl.BlockSpec(arr.shape, lambda i: (0, 0))

    out = pl.pallas_call(
        _critic_kernel,
        out_shape=jax.ShapeDtypeStruct((1, B), jnp.float32),
        grid=(B // batch_tile,),
        in_specs=[
            pl.BlockSpec((batch_tile, SA), lambda i: (i, 0)),   # [state|action]
            full_spec(w1),
            full_spec(w2),
            full_spec(w3),
            full_spec(pvec),
        ],
        out_specs=pl.BlockSpec((1, batch_tile), lambda i: (0, i)),
        compiler_params=pltpu.CompilerParams(
            dimension_semantics=("parallel",),
            vmem_limit_bytes=48 * 1024 * 1024),
    )(sa, w1, w2, w3, pvec)

    return out[0]  # (B,)  == squeeze(-1)


def init_critic_params(key, state_dim, action_dim, hidden_dim=256,
                       edac_init=True):
    """Deterministic synthetic init matching the PyTorch module's shapes.

    Linear weights are stored pre-transposed as (in, out); the final weight is
    stored as a (1, hidden_dim) row (w4^T).  These are the *original*
    (un-centered, f32) parameters; use prepare_critic_params for the kernel.
    """
    D = state_dim + action_dim
    ks = jax.random.split(key, 8)

    def uniform(k, bound, shape):
        return jax.random.uniform(k, shape, jnp.float32, -bound, bound)

    b1 = 1.0 / np.sqrt(D)
    bh = 1.0 / np.sqrt(hidden_dim)

    p = {}
    p["w1"] = uniform(ks[0], b1, (D, hidden_dim))
    p["b1"] = (jnp.full((1, hidden_dim), 0.1, jnp.float32) if edac_init
               else uniform(ks[1], b1, (1, hidden_dim)))
    p["g1"] = jnp.ones((1, hidden_dim), jnp.float32)
    p["be1"] = jnp.zeros((1, hidden_dim), jnp.float32)
    p["w2"] = uniform(ks[2], bh, (hidden_dim, hidden_dim))
    p["b2"] = (jnp.full((1, hidden_dim), 0.1, jnp.float32) if edac_init
               else uniform(ks[3], bh, (1, hidden_dim)))
    p["g2"] = jnp.ones((1, hidden_dim), jnp.float32)
    p["be2"] = jnp.zeros((1, hidden_dim), jnp.float32)
    p["w3"] = uniform(ks[4], bh, (hidden_dim, hidden_dim))
    p["b3"] = (jnp.full((1, hidden_dim), 0.1, jnp.float32) if edac_init
               else uniform(ks[5], bh, (1, hidden_dim)))
    p["g3"] = jnp.ones((1, hidden_dim), jnp.float32)
    p["be3"] = jnp.zeros((1, hidden_dim), jnp.float32)
    p["w4t"] = uniform(ks[6], 0.003 if edac_init else bh, (1, hidden_dim))
    p["b4"] = uniform(ks[7], 0.003 if edac_init else bh, (1, 1))
    return p


def critic_forward_ref(state, action, params):
    """Pure-JAX reference with the original params and torch LayerNorm semantics."""
    def ln_relu(h, g, be):
        mean = jnp.mean(h, axis=-1, keepdims=True)
        var = jnp.mean((h - mean) ** 2, axis=-1, keepdims=True)
        return jnp.maximum((h - mean) * jax.lax.rsqrt(var + LN_EPS) * g + be, 0.0)

    x = jnp.concatenate([state, action], axis=-1)
    h = ln_relu(x @ params["w1"] + params["b1"], params["g1"], params["be1"])
    h = ln_relu(h @ params["w2"] + params["b2"], params["g2"], params["be2"])
    h = ln_relu(h @ params["w3"] + params["b3"], params["g3"], params["be3"])
    q = h @ params["w4t"].T + params["b4"]
    return q[:, 0]


if __name__ == "__main__":
    key = jax.random.PRNGKey(0)
    k_state, k_action, k_params, k_s2, k_a2 = jax.random.split(key, 5)

    # Small demo shapes consistent with the module (hidden_dim uses the
    # module's default of 256, which is lane-aligned).
    batch, state_dim, action_dim, hidden_dim = 8, 12, 4, 256
    state = jax.random.normal(k_state, (batch, state_dim), jnp.float32)
    action = jax.random.normal(k_action, (batch, action_dim), jnp.float32)

    params = init_critic_params(k_params, state_dim, action_dim, hidden_dim)
    kparams = prepare_critic_params(params)   # one-time offline transform

    q = jax.block_until_ready(critic_forward(state, action, kparams))
    q_ref = jax.block_until_ready(critic_forward_ref(state, action, params))
    assert q.shape == (batch,)
    # bf16 matmuls + mean-free LN => looser tolerance vs the fp32 reference.
    np.testing.assert_allclose(np.asarray(q), np.asarray(q_ref),
                               rtol=5e-2, atol=5e-3)

    # Also exercise the tiled / multi-step-grid / lane-dense-output path.
    B2 = 256
    state2 = jax.random.normal(k_s2, (B2, state_dim), jnp.float32)
    action2 = jax.random.normal(k_a2, (B2, action_dim), jnp.float32)
    q2 = jax.block_until_ready(critic_forward(state2, action2, kparams))
    q2_ref = jax.block_until_ready(critic_forward_ref(state2, action2, params))
    assert q2.shape == (B2,)
    np.testing.assert_allclose(np.asarray(q2), np.asarray(q2_ref),
                               rtol=5e-2, atol=5e-3)

    print("KERNEL_OK")
</pallas_src>

<mosaic_0001>
module attributes {stable_mosaic.version = 11 : i64} {
  func.func @_critic_kernel(%arg0: i32, %arg1: memref<8x16xbf16, #tpu.memory_space<vmem>>, %arg2: memref<16x256xbf16, #tpu.memory_space<vmem>>, %arg3: memref<256x256xbf16, #tpu.memory_space<vmem>>, %arg4: memref<256x256xbf16, #tpu.memory_space<vmem>>, %arg5: memref<11x256xf32, #tpu.memory_space<vmem>>, %arg6: memref<1x8xf32, #tpu.memory_space<vmem>>) attributes {dimension_semantics = [#tpu.dimension_semantics<parallel>], iteration_bounds = array<i64: 1>, scalar_prefetch = 0 : i64, scratch_operands = 0 : i64, tpu.core_type = #tpu.core_type<tc>, window_params = [{transform_indices = @transform_0, window_bounds = array<i64: 8, 16>}, {pipeline_mode = #tpu.pipeline_mode<synchronous>, transform_indices = @transform_1, window_bounds = array<i64: 16, 256>}, {pipeline_mode = #tpu.pipeline_mode<synchronous>, transform_indices = @transform_2, window_bounds = array<i64: 256, 256>}, {pipeline_mode = #tpu.pipeline_mode<synchronous>, transform_indices = @transform_3, window_bounds = array<i64: 256, 256>}, {pipeline_mode = #tpu.pipeline_mode<synchronous>, transform_indices = @transform_4, window_bounds = array<i64: 11, 256>}, {transform_indices = @transform_5, window_bounds = array<i64: 1, 8>}]} {
    %c0 = arith.constant 0 : index
    %c0_0 = arith.constant 0 : index
    %0 = vector.load %arg1[%c0, %c0_0] : memref<8x16xbf16, #tpu.memory_space<vmem>>, vector<8x16xbf16>
    %c0_1 = arith.constant 0 : index
    %c0_2 = arith.constant 0 : index
    %1 = vector.load %arg2[%c0_1, %c0_2] : memref<16x256xbf16, #tpu.memory_space<vmem>>, vector<16x256xbf16>
    %cst = arith.constant dense<0.000000e+00> : vector<8x256xf32>
    %2 = tpu.matmul %0, %1, %cst {dimension_numbers = #tpu.dot_dimension_numbers<[1], [0], [0], [1], [0, 0, 1, 1], [], []>} : vector<8x16xbf16>, vector<16x256xbf16>, vector<8x256xf32> -> vector<8x256xf32>
    %c0_3 = arith.constant 0 : index
    %c0_4 = arith.constant 0 : index
    %3 = vector.load %arg5[%c0_3, %c0_4] : memref<11x256xf32, #tpu.memory_space<vmem>>, vector<1x256xf32>
    %4 = vector.broadcast %3 : vector<1x256xf32> to vector<8x256xf32>
    %5 = arith.addf %2, %4 : vector<8x256xf32>
    %c1 = arith.constant 1 : index
    %c0_5 = arith.constant 0 : index
    %6 = vector.load %arg5[%c1, %c0_5] : memref<11x256xf32, #tpu.memory_space<vmem>>, vector<1x256xf32>
    %c2 = arith.constant 2 : index
    %c0_6 = arith.constant 0 : index
    %7 = vector.load %arg5[%c2, %c0_6] : memref<11x256xf32, #tpu.memory_space<vmem>>, vector<1x256xf32>
    %8 = arith.mulf %5, %5 : vector<8x256xf32>
    %cst_7 = arith.constant dense<0.000000e+00> : vector<8xf32>
    %9 = vector.multi_reduction <add>, %8, %cst_7 [1] : vector<8x256xf32> to vector<8xf32>
    %10 = vector.shape_cast %9 : vector<8xf32> to vector<8x1xf32>
    %cst_8 = arith.constant 3.906250e-03 : f32
    %11 = vector.broadcast %cst_8 : f32 to vector<8x1xf32>
    %12 = arith.mulf %10, %11 : vector<8x1xf32>
    %cst_9 = arith.constant 9.99999974E-6 : f32
    %13 = vector.broadcast %cst_9 : f32 to vector<8x1xf32>
    %14 = arith.addf %12, %13 : vector<8x1xf32>
    %15 = math.rsqrt %14 : vector<8x1xf32>
    %16 = vector.broadcast %15 : vector<8x1xf32> to vector<8x256xf32>
    %17 = arith.mulf %5, %16 : vector<8x256xf32>
    %18 = vector.broadcast %6 : vector<1x256xf32> to vector<8x256xf32>
    %19 = arith.mulf %17, %18 : vector<8x256xf32>
    %20 = vector.broadcast %7 : vector<1x256xf32> to vector<8x256xf32>
    %21 = arith.addf %19, %20 : vector<8x256xf32>
    %cst_10 = arith.constant 0.000000e+00 : f32
    %22 = vector.broadcast %cst_10 : f32 to vector<8x256xf32>
    %23 = arith.maximumf %21, %22 : vector<8x256xf32>
    %24 = arith.truncf %23 : vector<8x256xf32> to vector<8x256xbf16>
    %c0_11 = arith.constant 0 : index
    %c0_12 = arith.constant 0 : index
    %25 = vector.load %arg3[%c0_11, %c0_12] : memref<256x256xbf16, #tpu.memory_space<vmem>>, vector<256x256xbf16>
    %cst_13 = arith.constant dense<0.000000e+00> : vector<8x256xf32>
    %26 = tpu.matmul %24, %25, %cst_13 {dimension_numbers = #tpu.dot_dimension_numbers<[1], [0], [0], [1], [0, 0, 1, 1], [], []>} : vector<8x256xbf16>, vector<256x256xbf16>, vector<8x256xf32> -> vector<8x256xf32>
    %c3 = arith.constant 3 : index
    %c0_14 = arith.constant 0 : index
    %27 = vector.load %arg5[%c3, %c0_14] : memref<11x256xf32, #tpu.memory_space<vmem>>, vector<1x256xf32>
    %28 = vector.broadcast %27 : vector<1x256xf32> to vector<8x256xf32>
    %29 = arith.addf %26, %28 : vector<8x256xf32>
    %c4 = arith.constant 4 : index
    %c0_15 = arith.constant 0 : index
    %30 = vector.load %arg5[%c4, %c0_15] : memref<11x256xf32, #tpu.memory_space<vmem>>, vector<1x256xf32>
    %c5 = arith.constant 5 : index
    %c0_16 = arith.constant 0 : index
    %31 = vector.load %arg5[%c5, %c0_16] : memref<11x256xf32, #tpu.memory_space<vmem>>, vector<1x256xf32>
    %32 = arith.mulf %29, %29 : vector<8x256xf32>
    %cst_17 = arith.constant dense<0.000000e+00> : vector<8xf32>
    %33 = vector.multi_reduction <add>, %32, %cst_17 [1] : vector<8x256xf32> to vector<8xf32>
    %34 = vector.shape_cast %33 : vector<8xf32> to vector<8x1xf32>
    %cst_18 = arith.constant 3.906250e-03 : f32
    %35 = vector.broadcast %cst_18 : f32 to vector<8x1xf32>
    %36 = arith.mulf %34, %35 : vector<8x1xf32>
    %cst_19 = arith.constant 9.99999974E-6 : f32
    %37 = vector.broadcast %cst_19 : f32 to vector<8x1xf32>
    %38 = arith.addf %36, %37 : vector<8x1xf32>
    %39 = math.rsqrt %38 : vector<8x1xf32>
    %40 = vector.broadcast %39 : vector<8x1xf32> to vector<8x256xf32>
    %41 = arith.mulf %29, %40 : vector<8x256xf32>
    %42 = vector.broadcast %30 : vector<1x256xf32> to vector<8x256xf32>
    %43 = arith.mulf %41, %42 : vector<8x256xf32>
    %44 = vector.broadcast %31 : vector<1x256xf32> to vector<8x256xf32>
    %45 = arith.addf %43, %44 : vector<8x256xf32>
    %cst_20 = arith.constant 0.000000e+00 : f32
    %46 = vector.broadcast %cst_20 : f32 to vector<8x256xf32>
    %47 = arith.maximumf %45, %46 : vector<8x256xf32>
    %48 = arith.truncf %47 : vector<8x256xf32> to vector<8x256xbf16>
    %c0_21 = arith.constant 0 : index
    %c0_22 = arith.constant 0 : index
    %49 = vector.load %arg4[%c0_21, %c0_22] : memref<256x256xbf16, #tpu.memory_space<vmem>>, vector<256x256xbf16>
    %cst_23 = arith.constant dense<0.000000e+00> : vector<8x256xf32>
    %50 = tpu.matmul %48, %49, %cst_23 {dimension_numbers = #tpu.dot_dimension_numbers<[1], [0], [0], [1], [0, 0, 1, 1], [], []>} : vector<8x256xbf16>, vector<256x256xbf16>, vector<8x256xf32> -> vector<8x256xf32>
    %c6 = arith.constant 6 : index
    %c0_24 = arith.constant 0 : index
    %51 = vector.load %arg5[%c6, %c0_24] : memref<11x256xf32, #tpu.memory_space<vmem>>, vector<1x256xf32>
    %52 = vector.broadcast %51 : vector<1x256xf32> to vector<8x256xf32>
    %53 = arith.addf %50, %52 : vector<8x256xf32>
    %c7 = arith.constant 7 : index
    %c0_25 = arith.constant 0 : index
    %54 = vector.load %arg5[%c7, %c0_25] : memref<11x256xf32, #tpu.memory_space<vmem>>, vector<1x256xf32>
    %c8 = arith.constant 8 : index
    %c0_26 = arith.constant 0 : index
    %55 = vector.load %arg5[%c8, %c0_26] : memref<11x256xf32, #tpu.memory_space<vmem>>, vector<1x256xf32>
    %56 = arith.mulf %53, %53 : vector<8x256xf32>
    %cst_27 = arith.constant dense<0.000000e+00> : vector<8xf32>
    %57 = vector.multi_reduction <add>, %56, %cst_27 [1] : vector<8x256xf32> to vector<8xf32>
    %58 = vector.shape_cast %57 : vector<8xf32> to vector<8x1xf32>
    %cst_28 = arith.constant 3.906250e-03 : f32
    %59 = vector.broadcast %cst_28 : f32 to vector<8x1xf32>
    %60 = arith.mulf %58, %59 : vector<8x1xf32>
    %cst_29 = arith.constant 9.99999974E-6 : f32
    %61 = vector.broadcast %cst_29 : f32 to vector<8x1xf32>
    %62 = arith.addf %60, %61 : vector<8x1xf32>
    %63 = math.rsqrt %62 : vector<8x1xf32>
    %64 = vector.broadcast %63 : vector<8x1xf32> to vector<8x256xf32>
    %65 = arith.mulf %53, %64 : vector<8x256xf32>
    %66 = vector.broadcast %54 : vector<1x256xf32> to vector<8x256xf32>
    %67 = arith.mulf %65, %66 : vector<8x256xf32>
    %68 = vector.broadcast %55 : vector<1x256xf32> to vector<8x256xf32>
    %69 = arith.addf %67, %68 : vector<8x256xf32>
    %cst_30 = arith.constant 0.000000e+00 : f32
    %70 = vector.broadcast %cst_30 : f32 to vector<8x256xf32>
    %71 = arith.maximumf %69, %70 : vector<8x256xf32>
    %c9 = arith.constant 9 : index
    %c0_31 = arith.constant 0 : index
    %72 = vector.load %arg5[%c9, %c0_31] : memref<11x256xf32, #tpu.memory_space<vmem>>, vector<1x256xf32>
    %cst_32 = arith.constant dense<0.000000e+00> : vector<1x8xf32>
    %73 = tpu.matmul %72, %71, %cst_32 {dimension_numbers = #tpu.dot_dimension_numbers<[1], [1], [0], [0], [0, 0, 1, 0], [], []>} : vector<1x256xf32>, vector<8x256xf32>, vector<1x8xf32> -> vector<1x8xf32>
    %c10 = arith.constant 10 : index
    %c0_33 = arith.constant 0 : index
    %74 = vector.load %arg5[%c10, %c0_33] : memref<11x256xf32, #tpu.memory_space<vmem>>, vector<1x1xf32>
    %75 = vector.broadcast %74 : vector<1x1xf32> to vector<1x8xf32>
    %76 = arith.addf %73, %75 : vector<1x8xf32>
    %c0_34 = arith.constant 0 : index
    %c0_35 = arith.constant 0 : index
    %77 = vector.load %arg6[%c0_34, %c0_35] : memref<1x8xf32, #tpu.memory_space<vmem>>, vector<1x8xf32>
    tpu.vector_store %arg6[%c0_34, %c0_35], %76 {strides = array<i32>} : memref<1x8xf32, #tpu.memory_space<vmem>>, vector<1x8xf32>,
    return
  }
  func.func @transform_0(%arg0: i32) -> (i32, i32) {
    %c0_i32 = arith.constant 0 : i32
    %c0_i32_0 = arith.constant 0 : i32
    return %arg0, %c0_i32 : i32, i32
  }
  func.func @transform_1(%arg0: i32) -> (i32, i32) {
    %c0_i32 = arith.constant 0 : i32
    %c0_i32_0 = arith.constant 0 : i32
    %c0_i32_1 = arith.constant 0 : i32
    return %c0_i32, %c0_i32_0 : i32, i32
  }
  func.func @transform_2(%arg0: i32) -> (i32, i32) {
    %c0_i32 = arith.constant 0 : i32
    %c0_i32_0 = arith.constant 0 : i32
    %c0_i32_1 = arith.constant 0 : i32
    return %c0_i32, %c0_i32_0 : i32, i32
  }
  func.func @transform_3(%arg0: i32) -> (i32, i32) {
    %c0_i32 = arith.constant 0 : i32
    %c0_i32_0 = arith.constant 0 : i32
    %c0_i32_1 = arith.constant 0 : i32
    return %c0_i32, %c0_i32_0 : i32, i32
  }
  func.func @transform_4(%arg0: i32) -> (i32, i32) {
    %c0_i32 = arith.constant 0 : i32
    %c0_i32_0 = arith.constant 0 : i32
    %c0_i32_1 = arith.constant 0 : i32
    return %c0_i32, %c0_i32_0 : i32, i32
  }
  func.func @transform_5(%arg0: i32) -> (i32, i32) {
    %c0_i32 = arith.constant 0 : i32
    %c0_i32_0 = arith.constant 0 : i32
    return %c0_i32, %arg0 : i32, i32
  }
}

</mosaic_0001>

<llo_original>
// kernel: tpu_custom_call.1
$region0: #{tpu_custom_call.1}
  #allocation0 [shape = 'u32[]', space=smem, size = 0x4, offset = 0x4, fixed_abs, tag = 'smem constant byte address 0x4 - core index']
  #allocation1 [shape = 'u32[144,128]{1,0:T(1,128)}', space=vmem, size = 0x12000, scoped, tag = 'internal scratch']
  %s0 = inlined_call_operand.hbm [shape: bf16[8,16], index: 0, kind: input, shape index: {}]
  %s1 = inlined_call_operand.hbm [shape: bf16[16,256], index: 1, kind: input, shape index: {}]
  %s2 = inlined_call_operand.hbm [shape: bf16[256,256], index: 2, kind: input, shape index: {}]
  %s3 = inlined_call_operand.hbm [shape: bf16[256,256], index: 3, kind: input, shape index: {}]
  %s4 = inlined_call_operand.hbm [shape: f32[11,256], index: 4, kind: input, shape index: {}]
  %s5 = inlined_call_operand.hbm [shape: f32[1,8], index: 5, kind: output, shape index: {}]
  %s6 = sld [smem:[#allocation0]]
  $region50: #{tpu_custom_call.1} parent=0
    _
  %s8 = ssub.s32 1, %s6
  %s9 = scalar_select 0, %s8, %s6
  $region1: #{tpu_custom_call.1} parent=0
    #allocation2 [shape = 'u8[2048]{0}', space=vmem, size = 0x800, scoped, tag = 'input window, operand 0, single buffered']
    #allocation3 [shape = 's32[1]{0}', space=sflag, size = 0x4, scoped, tag = 'scoped memory for tpu_custom_call.1']
    #allocation4 [shape = 's32[1]{0}', space=sflag, size = 0x4, scoped, tag = 'scoped memory for tpu_custom_call.1']
    #allocation5 [shape = 'u8[8192]{0}', space=vmem, size = 0x2000, scoped, tag = 'input window, operand 1, single buffered']
    #allocation6 [shape = 's32[1]{0}', space=sflag, size = 0x4, scoped, tag = 'scoped memory for tpu_custom_call.1']
    #allocation7 [shape = 'u8[131072]{0}', space=vmem, size = 0x20000, scoped, tag = 'input window, operand 2, single buffered']
    #allocation8 [shape = 'u8[131072]{0}', space=vmem, size = 0x20000, scoped, tag = 'input window, operand 3, single buffered']
    #allocation9 [shape = 's32[1]{0}', space=sflag, size = 0x4, scoped, tag = 'scoped memory for tpu_custom_call.1']
    #allocation10 [shape = 'u8[16384]{0}', space=vmem, size = 0x4000, scoped, tag = 'input window, operand 4, single buffered']
    #allocation11 [shape = 'u8[512]{0}', space=vmem, size = 0x400, scoped, tag = 'output window, operand 0, single buffered']
    %10 = vsyncpa [#allocation3], 0
    %11 = vsyncpa [#allocation6], 0
    %12 = vsyncpa [#allocation9], 0
    %13 = vsyncpa [#allocation4], 0
    // Predicated region
    $region2: #{tpu_custom_call.1} parent=1 // pred_check
      _
    $region3: #{tpu_custom_call.1} parent=1 // pred_check_branch
      %15 = sbr.rel (0) target = $region5
    $region4: #{tpu_custom_call.1} parent=1 // pred_region
      %s17 = ssub.s32 64, 64
      %18 = vsyncadd [#allocation3], %s17
      %s20 = sshll.u32 [#allocation2], 4
      %s21 = int_to_ptr.vmem [resolvable:$true] %s20
      %23 = dma.hbm_to_vmem [thread:$0]  %s0, 64, %s21, [#allocation3]
    $region5: #{tpu_custom_call.1} parent=1 // pred_fallthru
      _
    // Predicated region
    $region6: #{tpu_custom_call.1} parent=1 // pred_check
      _
    $region7: #{tpu_custom_call.1} parent=1 // pred_check_branch
      %25 = sbr.rel (0) target = $region9
    $region8: #{tpu_custom_call.1} parent=1 // pred_region
      %s27 = ssub.s32 256, 256
      %28 = vsyncadd [#allocation6], %s27
      %s29 = sshll.u32 [#allocation5], 4
      %s30 = int_to_ptr.vmem [resolvable:$true] %s29
      %35 = dma.hbm_to_vmem [thread:$0]  %s1, 256, %s30, [#allocation6], 128, 128, 8
    $region9: #{tpu_custom_call.1} parent=1 // pred_fallthru
      _
    // Predicated region
    $region10: #{tpu_custom_call.1} parent=1 // pred_check
      _
    $region11: #{tpu_custom_call.1} parent=1 // pred_check_branch
      %37 = sbr.rel (0) target = $region13
    $region12: #{tpu_custom_call.1} parent=1 // pred_region
      %s39 = ssub.s32 4096, 4096
      %40 = vsyncadd [#allocation6], %s39
      %s41 = sshll.u32 [#allocation7], 4
      %s42 = int_to_ptr.vmem [resolvable:$true] %s41
      %47 = dma.hbm_to_vmem [thread:$0]  %s2, 4096, %s42, [#allocation6], 128, 128, 8
    $region13: #{tpu_custom_call.1} parent=1 // pred_fallthru
      _
    // Predicated region
    $region14: #{tpu_custom_call.1} parent=1 // pred_check
      _
    $region15: #{tpu_custom_call.1} parent=1 // pred_check_branch
      %49 = sbr.rel (0) target = $region17
    $region16: #{tpu_custom_call.1} parent=1 // pred_region
      %s51 = ssub.s32 4096, 4096
      %52 = vsyncadd [#allocation9], %s51
      %s53 = sshll.u32 [#allocation8], 4
      %s54 = int_to_ptr.vmem [resolvable:$true] %s53
      %59 = dma.hbm_to_vmem [thread:$0]  %s3, 4096, %s54, [#allocation9], 128, 128, 8
    $region17: #{tpu_custom_call.1} parent=1 // pred_fallthru
      _
    // Predicated region
    $region18: #{tpu_custom_call.1} parent=1 // pred_check
      _
    $region19: #{tpu_custom_call.1} parent=1 // pred_check_branch
      %61 = sbr.rel (0) target = $region21
    $region20: #{tpu_custom_call.1} parent=1 // pred_region
      %s63 = ssub.s32 512, 512
      %64 = vsyncadd [#allocation9], %s63
      %s65 = sshll.u32 [#allocation10], 4
      %s66 = int_to_ptr.vmem [resolvable:$true] %s65
      %71 = dma.hbm_to_vmem [thread:$0]  %s4, 512, %s66, [#allocation9], 256, 256, 16
    $region21: #{tpu_custom_call.1} parent=1 // pred_fallthru
      _
    // Predicated region
    $region22: #{tpu_custom_call.1} parent=1 // pred_check
      _
    $region23: #{tpu_custom_call.1} parent=1 // pred_check_branch
      %73 = sbr.rel (0) target = $region25
    $region24: #{tpu_custom_call.1} parent=1 // pred_region
      %74 = dma.done [#allocation3], 64
    $region25: #{tpu_custom_call.1} parent=1 // pred_fallthru
      _
    // Predicated region
    $region26: #{tpu_custom_call.1} parent=1 // pred_check
      _
    $region27: #{tpu_custom_call.1} parent=1 // pred_check_branch
      %76 = sbr.rel (0) target = $region29
    $region28: #{tpu_custom_call.1} parent=1 // pred_region
      %77 = dma.done [#allocation6], 256
    $region29: #{tpu_custom_call.1} parent=1 // pred_fallthru
      _
    // Predicated region
    $region30: #{tpu_custom_call.1} parent=1 // pred_check
      _
    $region31: #{tpu_custom_call.1} parent=1 // pred_check_branch
      %79 = sbr.rel (0) target = $region33
    $region32: #{tpu_custom_call.1} parent=1 // pred_region
      %80 = dma.done [#allocation6], 4096
    $region33: #{tpu_custom_call.1} parent=1 // pred_fallthru
      _
    // Predicated region
    $region34: #{tpu_custom_call.1} parent=1 // pred_check
      _
    $region35: #{tpu_custom_call.1} parent=1 // pred_check_branch
      %82 = sbr.rel (0) target = $region37
    $region36: #{tpu_custom_call.1} parent=1 // pred_region
      %83 = dma.done [#allocation9], 4096
    $region37: #{tpu_custom_call.1} parent=1 // pred_fallthru
      _
    // Predicated region
    $region38: #{tpu_custom_call.1} parent=1 // pred_check
      _
    $region39: #{tpu_custom_call.1} parent=1 // pred_check_branch
      %85 = sbr.rel (0) target = $region41
    $region40: #{tpu_custom_call.1} parent=1 // pred_region
      %86 = dma.done [#allocation9], 512
    $region41: #{tpu_custom_call.1} parent=1 // pred_fallthru
      _
    %v88 = vld [vmem:[#allocation2] sm:$0xf]
    %v89 = vld [vmem:[#allocation5] sm:$0xff]
    %v90 = vld [vmem:[#allocation5 + $0x8] sm:$0xff]
    %v91 = vld [vmem:[#allocation10] ss:$8 sm:$0x3]
    %v93 = vlaneseq
    %v94 = vshrl.u32 %v93, 7
    %v95 = vsub.s32 0, %v94
    %v96 = vrot.slane %v91, %v95
    %v97 = vlaneseq
    %v98 = vshrl.u32 %v97, 7
    %v99 = vsub.s32 1, %v98
    %v100 = vrot.slane %v91, %v99
    %v105 = vunpack.c.l.b16 %v89
    %v106 = vunpack.c.h.b16 %v89
    %v107 = vunpack.c.l.b16 %v90
    %v108 = vunpack.c.h.b16 %v90
    %v109 = vpack.c.b16 %v107, %v105
    %v110 = vpack.c.b16 %v108, %v106
    %vm113 = vcmask 130048
    %v115 = vsel %vm113, %v88, 0
    %117 = vmatprep.subr.bf16.mxu0 0
    %118 = vmatpush1.bf16.msra.mxu0 0
    %119 = vmatprep.subr.bf16.mxu0 0
    %120 = vmatpush1.bf16.msra.mxu0 0
    %121 = vmatprep.subr.bf16.mxu0 0
    %122 = vmatpush1.bf16.msra.mxu0 0
    %123 = vmatprep.subr.bf16.mxu0 0
    %124 = vmatpush1.bf16.msra.mxu0 0
    %125 = vmatprep.subr.bf16.mxu0 0
    %126 = vmatpush1.bf16.msra.mxu0 0
    %127 = vmatprep.subr.bf16.mxu0 0
    %128 = vmatpush1.bf16.msra.mxu0 0
    %129 = vmatprep.subr.bf16.mxu0 0
    %130 = vmatpush1.bf16.msra.mxu0 0
    %131 = vmatprep.subr.bf16.mxu0 %v110
    %132 = vmatpush1.bf16.msra.mxu0 %v109
    %133 = vmatprep.subr.bf16.mxu0 0
    %134 = vmatpush2.bf16.msra.mxu0 0
    %135 = vmatprep.subr.bf16.mxu0 0
    %136 = vmatpush2.bf16.msra.mxu0 0
    %137 = vmatprep.subr.bf16.mxu0 0
    %138 = vmatpush2.bf16.msra.mxu0 0
    %139 = vmatprep.subr.bf16.mxu0 0
    %140 = vmatpush2.bf16.msra.mxu0 0
    %141 = vmatprep.subr.bf16.mxu0 0
    %142 = vmatpush2.bf16.msra.mxu0 0
    %143 = vmatprep.subr.bf16.mxu0 0
    %144 = vmatpush2.bf16.msra.mxu0 0
    %145 = vmatprep.subr.bf16.mxu0 0
    %146 = vmatpush2.bf16.msra.mxu0 0
    %147 = vmatprep.subr.bf16.mxu0 0
    %148 = vmatpush2.bf16.msra.mxu0 0
    %149 = vmatprep.mubr.bf16.mxu0 0
    %150 = vmatmul.mubr.bf16.gmra.mxu0 %v115
    %v151 = vpop.f32.mrf.mxu0
    %v152 = vadd.f32 %v96, %v151
    %v153 = vpop.f32.mrf.mxu0
    %v154 = vadd.f32 %v100, %v153
    %v155 = vpop.f32.mrf.mxu0
    %v156 = vpop.f32.mrf.mxu0
    %157 = vdwg.mxu0
    %s158 = scalar_lea.vmem [#allocation10], 1
    %v159 = vld [vmem:[%s158] ss:$8 sm:$0x3]
    %s160 = scalar_lea.vmem [#allocation10], 2
    %v161 = vld [vmem:[%s160] ss:$8 sm:$0x3]
    %v162 = vmul.f32 %v152, %v152
    %v163 = vmul.f32 %v154, %v154
    %v164 = vadd.f32 %v162, %v163
    %165 = vadd.xlane.f32.xlu0 %v164
    %v166 = vpop.xlane.xlu0 %165
    %v167 = vmul.f32 %v166, 0.00390625
    %v168 = vadd.f32 %v167, 1e-05
    %v169 = vrsqrt.pop %v168
    %v170 = vmul.f32 %v152, %v169
    %v171 = vmul.f32 %v154, %v169
    %v173 = vlaneseq
    %v174 = vshrl.u32 %v173, 7
    %v175 = vsub.s32 0, %v174
    %v176 = vrot.slane %v159, %v175
    %v177 = vlaneseq
    %v178 = vshrl.u32 %v177, 7
    %v179 = vsub.s32 1, %v178
    %v180 = vrot.slane %v159, %v179
    %v183 = vmul.f32 %v170, %v176
    %v184 = vmul.f32 %v171, %v180
    %v186 = vlaneseq
    %v187 = vshrl.u32 %v186, 7
    %v188 = vsub.s32 0, %v187
    %v189 = vrot.slane %v161, %v188
    %v190 = vlaneseq
    %v191 = vshrl.u32 %v190, 7
    %v192 = vsub.s32 1, %v191
    %v193 = vrot.slane %v161, %v192
    %v196 = vadd.f32 %v183, %v189
    %v197 = vadd.f32 %v184, %v193
    %v198 = vmax.f32 %v196, 0.0
    %v199 = vmax.f32 %v197, 0.0
    %v200 = vpack.c.bf16 %v198, %v198
    %v201 = vpack.c.bf16 %v199, %v199
    %v202 = vld [vmem:[#allocation7] sm:$0xff]
    %v203 = vld [vmem:[#allocation7 + $0x8] sm:$0xff]
    %v204 = vld [vmem:[#allocation7 + $0x10] sm:$0xff]
    %v205 = vld [vmem:[#allocation7 + $0x18] sm:$0xff]
    %v206 = vld [vmem:[#allocation7 + $0x20] sm:$0xff]
    %v207 = vld [vmem:[#allocation7 + $0x28] sm:$0xff]
    %v208 = vld [vmem:[#allocation7 + $0x30] sm:$0xff]
    %v209 = vld [vmem:[#allocation7 + $0x38] sm:$0xff]
    %v210 = vld [vmem:[#allocation7 + $0x40] sm:$0xff]
    %v211 = vld [vmem:[#allocation7 + $0x48] sm:$0xff]
    %v212 = vld [vmem:[#allocation7 + $0x50] sm:$0xff]
    %v213 = vld [vmem:[#allocation7 + $0x58] sm:$0xff]
    %v214 = vld [vmem:[#allocation7 + $0x60] sm:$0xff]
    %v215 = vld [vmem:[#allocation7 + $0x68] sm:$0xff]
    %v216 = vld [vmem:[#allocation7 + $0x70] sm:$0xff]
    %v217 = vld [vmem:[#allocation7 + $0x78] sm:$0xff]
    %v218 = vld [vmem:[#allocation7 + $0x80] sm:$0xff]
    %v219 = vld [vmem:[#allocation7 + $0x88] sm:$0xff]
    %v220 = vld [vmem:[#allocation7 + $0x90] sm:$0xff]
    %v221 = vld [vmem:[#allocation7 + $0x98] sm:$0xff]
    %v222 = vld [vmem:[#allocation7 + $0xa0] sm:$0xff]
    %v223 = vld [vmem:[#allocation7 + $0xa8] sm:$0xff]
    %v224 = vld [vmem:[#allocation7 + $0xb0] sm:$0xff]
    %v225 = vld [vmem:[#allocation7 + $0xb8] sm:$0xff]
    %v226 = vld [vmem:[#allocation7 + $0xc0] sm:$0xff]
    %v227 = vld [vmem:[#allocation7 + $0xc8] sm:$0xff]
    %v228 = vld [vmem:[#allocation7 + $0xd0] sm:$0xff]
    %v229 = vld [vmem:[#allocation7 + $0xd8] sm:$0xff]
    %v230 = vld [vmem:[#allocation7 + $0xe0] sm:$0xff]
    %v231 = vld [vmem:[#allocation7 + $0xe8] sm:$0xff]
    %v232 = vld [vmem:[#allocation7 + $0xf0] sm:$0xff]
    %v233 = vld [vmem:[#allocation7 + $0xf8] sm:$0xff]
    %s234 = scalar_lea.vmem [#allocation10], 3
    %v235 = vld [vmem:[%s234] ss:$8 sm:$0x3]
    %v237 = vlaneseq
    %v238 = vshrl.u32 %v237, 7
    %v239 = vsub.s32 0, %v238
    %v240 = vrot.slane %v235, %v239
    %v241 = vlaneseq
    %v242 = vshrl.u32 %v241, 7
    %v243 = vsub.s32 1, %v242
    %v244 = vrot.slane %v235, %v243
    %v279 = vunpack.c.l.b16 %v202
    %v280 = vunpack.c.h.b16 %v202
    %v281 = vunpack.c.l.b16 %v203
    %v282 = vunpack.c.h.b16 %v203
    %v283 = vunpack.c.l.b16 %v204
    %v284 = vunpack.c.h.b16 %v204
    %v285 = vunpack.c.l.b16 %v205
    %v286 = vunpack.c.h.b16 %v205
    %v287 = vunpack.c.l.b16 %v206
    %v288 = vunpack.c.h.b16 %v206
    %v289 = vunpack.c.l.b16 %v207
    %v290 = vunpack.c.h.b16 %v207
    %v291 = vunpack.c.l.b16 %v208
    %v292 = vunpack.c.h.b16 %v208
    %v293 = vunpack.c.l.b16 %v209
    %v294 = vunpack.c.h.b16 %v209
    %v295 = vunpack.c.l.b16 %v210
    %v296 = vunpack.c.h.b16 %v210
    %v297 = vunpack.c.l.b16 %v211
    %v298 = vunpack.c.h.b16 %v211
    %v299 = vunpack.c.l.b16 %v212
    %v300 = vunpack.c.h.b16 %v212
    %v301 = vunpack.c.l.b16 %v213
    %v302 = vunpack.c.h.b16 %v213
    %v303 = vunpack.c.l.b16 %v214
    %v304 = vunpack.c.h.b16 %v214
    %v305 = vunpack.c.l.b16 %v215
    %v306 = vunpack.c.h.b16 %v215
    %v307 = vunpack.c.l.b16 %v216
    %v308 = vunpack.c.h.b16 %v216
    %v309 = vunpack.c.l.b16 %v217
    %v310 = vunpack.c.h.b16 %v217
    %v311 = vunpack.c.l.b16 %v218
    %v312 = vunpack.c.h.b16 %v218
    %v313 = vunpack.c.l.b16 %v219
    %v314 = vunpack.c.h.b16 %v219
    %v315 = vunpack.c.l.b16 %v220
    %v316 = vunpack.c.h.b16 %v220
    %v317 = vunpack.c.l.b16 %v221
    %v318 = vunpack.c.h.b16 %v221
    %v319 = vunpack.c.l.b16 %v222
    %v320 = vunpack.c.h.b16 %v222
    %v321 = vunpack.c.l.b16 %v223
    %v322 = vunpack.c.h.b16 %v223
    %v323 = vunpack.c.l.b16 %v224
    %v324 = vunpack.c.h.b16 %v224
    %v325 = vunpack.c.l.b16 %v225
    %v326 = vunpack.c.h.b16 %v225
    %v327 = vunpack.c.l.b16 %v226
    %v328 = vunpack.c.h.b16 %v226
    %v329 = vunpack.c.l.b16 %v227
    %v330 = vunpack.c.h.b16 %v227
    %v331 = vunpack.c.l.b16 %v228
    %v332 = vunpack.c.h.b16 %v228
    %v333 = vunpack.c.l.b16 %v229
    %v334 = vunpack.c.h.b16 %v229
    %v335 = vunpack.c.l.b16 %v230
    %v336 = vunpack.c.h.b16 %v230
    %v337 = vunpack.c.l.b16 %v231
    %v338 = vunpack.c.h.b16 %v231
    %v339 = vunpack.c.l.b16 %v232
    %v340 = vunpack.c.h.b16 %v232
    %v341 = vunpack.c.l.b16 %v233
    %v342 = vunpack.c.h.b16 %v233
    %v343 = vpack.c.b16 %v281, %v279
    %v344 = vpack.c.b16 %v282, %v280
    %v345 = vpack.c.b16 %v285, %v283
    %v346 = vpack.c.b16 %v286, %v284
    %v347 = vpack.c.b16 %v289, %v287
    %v348 = vpack.c.b16 %v290, %v288
    %v349 = vpack.c.b16 %v293, %v291
    %v350 = vpack.c.b16 %v294, %v292
    %v351 = vpack.c.b16 %v297, %v295
    %v352 = vpack.c.b16 %v298, %v296
    %v353 = vpack.c.b16 %v301, %v299
    %v354 = vpack.c.b16 %v302, %v300
    %v355 = vpack.c.b16 %v305, %v303
    %v356 = vpack.c.b16 %v306, %v304
    %v357 = vpack.c.b16 %v309, %v307
    %v358 = vpack.c.b16 %v310, %v308
    %v359 = vpack.c.b16 %v313, %v311
    %v360 = vpack.c.b16 %v314, %v312
    %v361 = vpack.c.b16 %v317, %v315
    %v362 = vpack.c.b16 %v318, %v316
    %v363 = vpack.c.b16 %v321, %v319
    %v364 = vpack.c.b16 %v322, %v320
    %v365 = vpack.c.b16 %v325, %v323
    %v366 = vpack.c.b16 %v326, %v324
    %v367 = vpack.c.b16 %v329, %v327
    %v368 = vpack.c.b16 %v330, %v328
    %v369 = vpack.c.b16 %v333, %v331
    %v370 = vpack.c.b16 %v334, %v332
    %v371 = vpack.c.b16 %v337, %v335
    %v372 = vpack.c.b16 %v338, %v336
    %v373 = vpack.c.b16 %v341, %v339
    %v374 = vpack.c.b16 %v342, %v340
    %407 = vmatprep.subr.bf16.mxu0 %v358
    %408 = vmatpush1.bf16.msra.mxu0 %v357
    %409 = vmatprep.subr.bf16.mxu0 %v356
    %410 = vmatpush1.bf16.msra.mxu0 %v355
    %411 = vmatprep.subr.bf16.mxu0 %v354
    %412 = vmatpush1.bf16.msra.mxu0 %v353
    %413 = vmatprep.subr.bf16.mxu0 %v352
    %414 = vmatpush1.bf16.msra.mxu0 %v351
    %415 = vmatprep.subr.bf16.mxu0 %v350
    %416 = vmatpush1.bf16.msra.mxu0 %v349
    %417 = vmatprep.subr.bf16.mxu0 %v348
    %418 = vmatpush1.bf16.msra.mxu0 %v347
    %419 = vmatprep.subr.bf16.mxu0 %v346
    %420 = vmatpush1.bf16.msra.mxu0 %v345
    %421 = vmatprep.subr.bf16.mxu0 %v344
    %422 = vmatpush1.bf16.msra.mxu0 %v343
    %423 = vmatprep.subr.bf16.mxu0 %v374
    %424 = vmatpush2.bf16.msra.mxu0 %v373
    %425 = vmatprep.subr.bf16.mxu0 %v372
    %426 = vmatpush2.bf16.msra.mxu0 %v371
    %427 = vmatprep.subr.bf16.mxu0 %v370
    %428 = vmatpush2.bf16.msra.mxu0 %v369
    %429 = vmatprep.subr.bf16.mxu0 %v368
    %430 = vmatpush2.bf16.msra.mxu0 %v367
    %431 = vmatprep.subr.bf16.mxu0 %v366
    %432 = vmatpush2.bf16.msra.mxu0 %v365
    %433 = vmatprep.subr.bf16.mxu0 %v364
    %434 = vmatpush2.bf16.msra.mxu0 %v363
    %435 = vmatprep.subr.bf16.mxu0 %v362
    %436 = vmatpush2.bf16.msra.mxu0 %v361
    %437 = vmatprep.subr.bf16.mxu0 %v360
    %438 = vmatpush2.bf16.msra.mxu0 %v359
    %439 = vmatprep.mubr.bf16.mxu0 %v201
    %440 = vmatmul.mubr.bf16.gmra.mxu0 %v200
    %v441 = vpop.f32.mrf.mxu0
    %v442 = vadd.f32 %v240, %v441
    %v443 = vpop.f32.mrf.mxu0
    %v444 = vadd.f32 %v244, %v443
    %v445 = vpop.f32.mrf.mxu0
    %v446 = vpop.f32.mrf.mxu0
    %447 = vdwg.mxu0
    %s448 = scalar_lea.vmem [#allocation10], 4
    %v449 = vld [vmem:[%s448] ss:$8 sm:$0x3]
    %s450 = scalar_lea.vmem [#allocation10], 5
    %v451 = vld [vmem:[%s450] ss:$8 sm:$0x3]
    %v452 = vmul.f32 %v442, %v442
    %v453 = vmul.f32 %v444, %v444
    %v454 = vadd.f32 %v452, %v453
    %455 = vadd.xlane.f32.xlu0 %v454
    %v456 = vpop.xlane.xlu0 %455
    %v457 = vmul.f32 %v456, 0.00390625
    %v458 = vadd.f32 %v457, 1e-05
    %v459 = vrsqrt.pop %v458
    %v460 = vmul.f32 %v442, %v459
    %v461 = vmul.f32 %v444, %v459
    %v463 = vlaneseq
    %v464 = vshrl.u32 %v463, 7
    %v465 = vsub.s32 0, %v464
    %v466 = vrot.slane %v449, %v465
    %v467 = vlaneseq
    %v468 = vshrl.u32 %v467, 7
    %v469 = vsub.s32 1, %v468
    %v470 = vrot.slane %v449, %v469
    %v473 = vmul.f32 %v460, %v466
    %v474 = vmul.f32 %v461, %v470
    %v476 = vlaneseq
    %v477 = vshrl.u32 %v476, 7
    %v478 = vsub.s32 0, %v477
    %v479 = vrot.slane %v451, %v478
    %v480 = vlaneseq
    %v481 = vshrl.u32 %v480, 7
    %v482 = vsub.s32 1, %v481
    %v483 = vrot.slane %v451, %v482
    %v486 = vadd.f32 %v473, %v479
    %v487 = vadd.f32 %v474, %v483
    %v488 = vmax.f32 %v486, 0.0
    %v489 = vmax.f32 %v487, 0.0
    %v490 = vpack.c.bf16 %v488, %v488
    %v491 = vpack.c.bf16 %v489, %v489
    %v492 = vld [vmem:[#allocation8] sm:$0xff]
    %v493 = vld [vmem:[#allocation8 + $0x8] sm:$0xff]
    %v494 = vld [vmem:[#allocation8 + $0x10] sm:$0xff]
    %v495 = vld [vmem:[#allocation8 + $0x18] sm:$0xff]
    %v496 = vld [vmem:[#allocation8 + $0x20] sm:$0xff]
    %v497 = vld [vmem:[#allocation8 + $0x28] sm:$0xff]
    %v498 = vld [vmem:[#allocation8 + $0x30] sm:$0xff]
    %v499 = vld [vmem:[#allocation8 + $0x38] sm:$0xff]
    %v500 = vld [vmem:[#allocation8 + $0x40] sm:$0xff]
    %v501 = vld [vmem:[#allocation8 + $0x48] sm:$0xff]
    %v502 = vld [vmem:[#allocation8 + $0x50] sm:$0xff]
    %v503 = vld [vmem:[#allocation8 + $0x58] sm:$0xff]
    %v504 = vld [vmem:[#allocation8 + $0x60] sm:$0xff]
    %v505 = vld [vmem:[#allocation8 + $0x68] sm:$0xff]
    %v506 = vld [vmem:[#allocation8 + $0x70] sm:$0xff]
    %v507 = vld [vmem:[#allocation8 + $0x78] sm:$0xff]
    %v508 = vld [vmem:[#allocation8 + $0x80] sm:$0xff]
    %v509 = vld [vmem:[#allocation8 + $0x88] sm:$0xff]
    %v510 = vld [vmem:[#allocation8 + $0x90] sm:$0xff]
    %v511 = vld [vmem:[#allocation8 + $0x98] sm:$0xff]
    %v512 = vld [vmem:[#allocation8 + $0xa0] sm:$0xff]
    %v513 = vld [vmem:[#allocation8 + $0xa8] sm:$0xff]
    %v514 = vld [vmem:[#allocation8 + $0xb0] sm:$0xff]
    %v515 = vld [vmem:[#allocation8 + $0xb8] sm:$0xff]
    %v516 = vld [vmem:[#allocation8 + $0xc0] sm:$0xff]
    %v517 = vld [vmem:[#allocation8 + $0xc8] sm:$0xff]
    %v518 = vld [vmem:[#allocation8 + $0xd0] sm:$0xff]
    %v519 = vld [vmem:[#allocation8 + $0xd8] sm:$0xff]
    %v520 = vld [vmem:[#allocation8 + $0xe0] sm:$0xff]
    %v521 = vld [vmem:[#allocation8 + $0xe8] sm:$0xff]
    %v522 = vld [vmem:[#allocation8 + $0xf0] sm:$0xff]
    %v523 = vld [vmem:[#allocation8 + $0xf8] sm:$0xff]
    %s524 = scalar_lea.vmem [#allocation10], 6
    %v525 = vld [vmem:[%s524] ss:$8 sm:$0x3]
    %v527 = vlaneseq
    %v528 = vshrl.u32 %v527, 7
    %v529 = vsub.s32 0, %v528
    %v530 = vrot.slane %v525, %v529
    %v531 = vlaneseq
    %v532 = vshrl.u32 %v531, 7
    %v533 = vsub.s32 1, %v532
    %v534 = vrot.slane %v525, %v533
    %v569 = vunpack.c.l.b16 %v492
    %v570 = vunpack.c.h.b16 %v492
    %v571 = vunpack.c.l.b16 %v493
    %v572 = vunpack.c.h.b16 %v493
    %v573 = vunpack.c.l.b16 %v494
    %v574 = vunpack.c.h.b16 %v494
    %v575 = vunpack.c.l.b16 %v495
    %v576 = vunpack.c.h.b16 %v495
    %v577 = vunpack.c.l.b16 %v496
    %v578 = vunpack.c.h.b16 %v496
    %v579 = vunpack.c.l.b16 %v497
    %v580 = vunpack.c.h.b16 %v497
    %v581 = vunpack.c.l.b16 %v498
    %v582 = vunpack.c.h.b16 %v498
    %v583 = vunpack.c.l.b16 %v499
    %v584 = vunpack.c.h.b16 %v499
    %v585 = vunpack.c.l.b16 %v500
    %v586 = vunpack.c.h.b16 %v500
    %v587 = vunpack.c.l.b16 %v501
    %v588 = vunpack.c.h.b16 %v501
    %v589 = vunpack.c.l.b16 %v502
    %v590 = vunpack.c.h.b16 %v502
    %v591 = vunpack.c.l.b16 %v503
    %v592 = vunpack.c.h.b16 %v503
    %v593 = vunpack.c.l.b16 %v504
    %v594 = vunpack.c.h.b16 %v504
    %v595 = vunpack.c.l.b16 %v505
    %v596 = vunpack.c.h.b16 %v505
    %v597 = vunpack.c.l.b16 %v506
    %v598 = vunpack.c.h.b16 %v506
    %v599 = vunpack.c.l.b16 %v507
    %v600 = vunpack.c.h.b16 %v507
    %v601 = vunpack.c.l.b16 %v508
    %v602 = vunpack.c.h.b16 %v508
    %v603 = vunpack.c.l.b16 %v509
    %v604 = vunpack.c.h.b16 %v509
    %v605 = vunpack.c.l.b16 %v510
    %v606 = vunpack.c.h.b16 %v510
    %v607 = vunpack.c.l.b16 %v511
    %v608 = vunpack.c.h.b16 %v511
    %v609 = vunpack.c.l.b16 %v512
    %v610 = vunpack.c.h.b16 %v512
    %v611 = vunpack.c.l.b16 %v513
    %v612 = vunpack.c.h.b16 %v513
    %v613 = vunpack.c.l.b16 %v514
    %v614 = vunpack.c.h.b16 %v514
    %v615 = vunpack.c.l.b16 %v515
    %v616 = vunpack.c.h.b16 %v515
    %v617 = vunpack.c.l.b16 %v516
    %v618 = vunpack.c.h.b16 %v516
    %v619 = vunpack.c.l.b16 %v517
    %v620 = vunpack.c.h.b16 %v517
    %v621 = vunpack.c.l.b16 %v518
    %v622 = vunpack.c.h.b16 %v518
    %v623 = vunpack.c.l.b16 %v519
    %v624 = vunpack.c.h.b16 %v519
    %v625 = vunpack.c.l.b16 %v520
    %v626 = vunpack.c.h.b16 %v520
    %v627 = vunpack.c.l.b16 %v521
    %v628 = vunpack.c.h.b16 %v521
    %v629 = vunpack.c.l.b16 %v522
    %v630 = vunpack.c.h.b16 %v522
    %v631 = vunpack.c.l.b16 %v523
    %v632 = vunpack.c.h.b16 %v523
    %v633 = vpack.c.b16 %v571, %v569
    %v634 = vpack.c.b16 %v572, %v570
    %v635 = vpack.c.b16 %v575, %v573
    %v636 = vpack.c.b16 %v576, %v574
    %v637 = vpack.c.b16 %v579, %v577
    %v638 = vpack.c.b16 %v580, %v578
    %v639 = vpack.c.b16 %v583, %v581
    %v640 = vpack.c.b16 %v584, %v582
    %v641 = vpack.c.b16 %v587, %v585
    %v642 = vpack.c.b16 %v588, %v586
    %v643 = vpack.c.b16 %v591, %v589
    %v644 = vpack.c.b16 %v592, %v590
    %v645 = vpack.c.b16 %v595, %v593
    %v646 = vpack.c.b16 %v596, %v594
    %v647 = vpack.c.b16 %v599, %v597
    %v648 = vpack.c.b16 %v600, %v598
    %v649 = vpack.c.b16 %v603, %v601
    %v650 = vpack.c.b16 %v604, %v602
    %v651 = vpack.c.b16 %v607, %v605
    %v652 = vpack.c.b16 %v608, %v606
    %v653 = vpack.c.b16 %v611, %v609
    %v654 = vpack.c.b16 %v612, %v610
    %v655 = vpack.c.b16 %v615, %v613
    %v656 = vpack.c.b16 %v616, %v614
    %v657 = vpack.c.b16 %v619, %v617
    %v658 = vpack.c.b16 %v620, %v618
    %v659 = vpack.c.b16 %v623, %v621
    %v660 = vpack.c.b16 %v624, %v622
    %v661 = vpack.c.b16 %v627, %v625
    %v662 = vpack.c.b16 %v628, %v626
    %v663 = vpack.c.b16 %v631, %v629
    %v664 = vpack.c.b16 %v632, %v630
    %697 = vmatprep.subr.bf16.mxu0 %v648
    %698 = vmatpush1.bf16.msra.mxu0 %v647
    %699 = vmatprep.subr.bf16.mxu0 %v646
    %700 = vmatpush1.bf16.msra.mxu0 %v645
    %701 = vmatprep.subr.bf16.mxu0 %v644
    %702 = vmatpush1.bf16.msra.mxu0 %v643
    %703 = vmatprep.subr.bf16.mxu0 %v642
    %704 = vmatpush1.bf16.msra.mxu0 %v641
    %705 = vmatprep.subr.bf16.mxu0 %v640
    %706 = vmatpush1.bf16.msra.mxu0 %v639
    %707 = vmatprep.subr.bf16.mxu0 %v638
    %708 = vmatpush1.bf16.msra.mxu0 %v637
    %709 = vmatprep.subr.bf16.mxu0 %v636
    %710 = vmatpush1.bf16.msra.mxu0 %v635
    %711 = vmatprep.subr.bf16.mxu0 %v634
    %712 = vmatpush1.bf16.msra.mxu0 %v633
    %713 = vmatprep.subr.bf16.mxu0 %v664
    %714 = vmatpush2.bf16.msra.mxu0 %v663
    %715 = vmatprep.subr.bf16.mxu0 %v662
    %716 = vmatpush2.bf16.msra.mxu0 %v661
    %717 = vmatprep.subr.bf16.mxu0 %v660
    %718 = vmatpush2.bf16.msra.mxu0 %v659
    %719 = vmatprep.subr.bf16.mxu0 %v658
    %720 = vmatpush2.bf16.msra.mxu0 %v657
    %721 = vmatprep.subr.bf16.mxu0 %v656
    %722 = vmatpush2.bf16.msra.mxu0 %v655
    %723 = vmatprep.subr.bf16.mxu0 %v654
    %724 = vmatpush2.bf16.msra.mxu0 %v653
    %725 = vmatprep.subr.bf16.mxu0 %v652
    %726 = vmatpush2.bf16.msra.mxu0 %v651
    %727 = vmatprep.subr.bf16.mxu0 %v650
    %728 = vmatpush2.bf16.msra.mxu0 %v649
    %729 = vmatprep.mubr.bf16.mxu0 %v491
    %730 = vmatmul.mubr.bf16.gmra.mxu0 %v490
    %v731 = vpop.f32.mrf.mxu0
    %v732 = vadd.f32 %v530, %v731
    %v733 = vpop.f32.mrf.mxu0
    %v734 = vadd.f32 %v534, %v733
    %v735 = vpop.f32.mrf.mxu0
    %v736 = vpop.f32.mrf.mxu0
    %737 = vdwg.mxu0
    %s738 = scalar_lea.vmem [#allocation10], 7
    %v739 = vld [vmem:[%s738] ss:$8 sm:$0x3]
    %s740 = scalar_lea.vmem [#allocation10], 16
    %v741 = vld [vmem:[%s740] ss:$8 sm:$0x3]
    %v742 = vmul.f32 %v732, %v732
    %v743 = vmul.f32 %v734, %v734
    %v744 = vadd.f32 %v742, %v743
    %745 = vadd.xlane.f32.xlu0 %v744
    %v746 = vpop.xlane.xlu0 %745
    %v747 = vmul.f32 %v746, 0.00390625
    %v748 = vadd.f32 %v747, 1e-05
    %v749 = vrsqrt.pop %v748
    %v750 = vmul.f32 %v732, %v749
    %v751 = vmul.f32 %v734, %v749
    %v753 = vlaneseq
    %v754 = vshrl.u32 %v753, 7
    %v755 = vsub.s32 0, %v754
    %v756 = vrot.slane %v739, %v755
    %v757 = vlaneseq
    %v758 = vshrl.u32 %v757, 7
    %v759 = vsub.s32 1, %v758
    %v760 = vrot.slane %v739, %v759
    %v763 = vmul.f32 %v750, %v756
    %v764 = vmul.f32 %v751, %v760
    %v766 = vlaneseq
    %v767 = vshrl.u32 %v766, 7
    %v768 = vsub.s32 0, %v767
    %v769 = vrot.slane %v741, %v768
    %v770 = vlaneseq
    %v771 = vshrl.u32 %v770, 7
    %v772 = vsub.s32 1, %v771
    %v773 = vrot.slane %v741, %v772
    %v776 = vadd.f32 %v763, %v769
    %v777 = vadd.f32 %v764, %v773
    %v778 = vmax.f32 %v776, 0.0
    %v779 = vmax.f32 %v777, 0.0
    %s780 = scalar_lea.vmem [#allocation10], 17
    %v781 = vld [vmem:[%s780] ss:$8 sm:$0x3]
    %v782 = vld [vmem:[#allocation10 + $0x12] ss:$0 sm:$0xff]
    %784 = vset.pattern.permute.xlu0 0
    %785 = vperm.xlu0 %784, %v782
    %v786 = vpop.permute.xlu0 %785
    %v789 = vlaneseq
    %v790 = vshrl.u32 %v789, 7
    %v791 = vsub.s32 0, %v790
    %v792 = vrot.slane %v781, %v791
    %v793 = vlaneseq
    %v794 = vshrl.u32 %v793, 7
    %v795 = vsub.s32 1, %v794
    %v796 = vrot.slane %v781, %v795
    %799 = vmatprep.subr.mxu0 0.0
    %800 = vmatpush1.xpose.msra.mxu0 0.0
    %801 = vmatprep.subr.mxu0 0.0
    %802 = vmatpush1.xpose.msra.mxu0 0.0
    %803 = vmatprep.subr.mxu0 0.0
    %804 = vmatpush1.xpose.msra.mxu0 0.0
    %805 = vmatprep.subr.mxu0 0.0
    %806 = vmatpush1.xpose.msra.mxu0 0.0
    %807 = vmatprep.subr.mxu0 0.0
    %808 = vmatpush1.xpose.msra.mxu0 0.0
    %809 = vmatprep.subr.mxu0 0.0
    %810 = vmatpush1.xpose.msra.mxu0 0.0
    %811 = vmatprep.subr.mxu0 0.0
    %812 = vmatpush1.xpose.msra.mxu0 0.0
    %813 = vmatprep.subr.mxu0 0.0
    %814 = vmatpush1.xpose.msra.mxu0 0.0
    %815 = vmatprep.subr.mxu0 0.0
    %816 = vmatpush1.xpose.msra.mxu0 0.0
    %817 = vmatprep.subr.mxu0 0.0
    %818 = vmatpush1.xpose.msra.mxu0 0.0
    %819 = vmatprep.subr.mxu0 0.0
    %820 = vmatpush1.xpose.msra.mxu0 0.0
    %821 = vmatprep.subr.mxu0 0.0
    %822 = vmatpush1.xpose.msra.mxu0 0.0
    %823 = vmatprep.subr.mxu0 0.0
    %824 = vmatpush1.xpose.msra.mxu0 0.0
    %825 = vmatprep.subr.mxu0 0.0
    %826 = vmatpush1.xpose.msra.mxu0 0.0
    %827 = vmatprep.subr.mxu0 0.0
    %828 = vmatpush1.xpose.msra.mxu0 0.0
    %829 = vmatprep.subr.mxu0 %v779
    %830 = vmatpush1.xpose.msra.mxu0 %v778
    %831 = vmatprep.subr.mxu0 0.0
    %832 = vmatpush2.xpose.msra.mxu0 0.0
    %833 = vmatprep.subr.mxu0 0.0
    %834 = vmatpush2.xpose.msra.mxu0 0.0
    %835 = vmatprep.subr.mxu0 0.0
    %836 = vmatpush2.xpose.msra.mxu0 0.0
    %837 = vmatprep.subr.mxu0 0.0
    %838 = vmatpush2.xpose.msra.mxu0 0.0
    %839 = vmatprep.subr.mxu0 0.0
    %840 = vmatpush2.xpose.msra.mxu0 0.0
    %841 = vmatprep.subr.mxu0 0.0
    %842 = vmatpush2.xpose.msra.mxu0 0.0
    %843 = vmatprep.subr.mxu0 0.0
    %844 = vmatpush2.xpose.msra.mxu0 0.0
    %845 = vmatprep.subr.mxu0 0.0
    %846 = vmatpush2.xpose.msra.mxu0 0.0
    %847 = vmatprep.subr.mxu0 0.0
    %848 = vmatpush2.xpose.msra.mxu0 0.0
    %849 = vmatprep.subr.mxu0 0.0
    %850 = vmatpush2.xpose.msra.mxu0 0.0
    %851 = vmatprep.subr.mxu0 0.0
    %852 = vmatpush2.xpose.msra.mxu0 0.0
    %853 = vmatprep.subr.mxu0 0.0
    %854 = vmatpush2.xpose.msra.mxu0 0.0
    %855 = vmatprep.subr.mxu0 0.0
    %856 = vmatpush2.xpose.msra.mxu0 0.0
    %857 = vmatprep.subr.mxu0 0.0
    %858 = vmatpush2.xpose.msra.mxu0 0.0
    %859 = vmatprep.subr.mxu0 0.0
    %860 = vmatpush2.xpose.msra.mxu0 0.0
    %861 = vmatprep.subr.mxu0 0.0
    %862 = vmatpush2.xpose.msra.mxu0 0.0
    %863 = vmatprep.mubr.f32.mxu0 %v796
    %864 = vmatmul.mubr.f32.gmra.mxu0 %v792
    %v865 = vpop.f32.mrf.mxu0
    %v866 = vadd.f32 %v786, %v865
    %v867 = vpop.f32.mrf.mxu0
    %868 = vdwg.mxu0
    %vm869 = vcmask 57344
    %870 = vst.msk [vmem:[#allocation11] sm:$0x1] %vm869, %v866
    // Predicated region
    $region42: #{tpu_custom_call.1} parent=1 // pred_check
      _
    $region43: #{tpu_custom_call.1} parent=1 // pred_check_branch
      %872 = sbr.rel (0) target = $region45
    $region44: #{tpu_custom_call.1} parent=1 // pred_region
      %s874 = ssub.s32 16, 16
      %875 = vsyncadd [#allocation4], %s874
      %s877 = sshll.u32 [#allocation11], 4
      %s878 = int_to_ptr.vmem [resolvable:$true] %s877
      %880 = dma.vmem_to_hbm [thread:$0]  %s878, 16, %s5, [#allocation4]
    $region45: #{tpu_custom_call.1} parent=1 // pred_fallthru
      _
    // Predicated region
    $region46: #{tpu_custom_call.1} parent=1 // pred_check
      _
    $region47: #{tpu_custom_call.1} parent=1 // pred_check_branch
      %882 = sbr.rel (0) target = $region49
    $region48: #{tpu_custom_call.1} parent=1 // pred_region
      %883 = dma.done [#allocation4], 16
    $region49: #{tpu_custom_call.1} parent=1 // pred_fallthru
      _
    %884 = vsyncpa [#allocation3], 1
    %885 = vsyncpa [#allocation6], 1
    %886 = vsyncpa [#allocation9], 1
    %887 = vsyncpa [#allocation4], 1

</llo_original>
